<compile_context>
chip_gen: v7x
topology: tpu7x:2x2x1
jax: 0.10.0
libtpu: 0.0.40
codegen_flags: <defaults>
</compile_context>

<pallas_src>
import jax
import jax.numpy as jnp
from jax.experimental import pallas as pl
from jax.experimental.pallas import tpu as pltpu


def _round_up(x, m):
    return ((x + m - 1) // m) * m


def _vmem_capacity_bytes():
    """Per-generation VMEM capacity; v7x-safe fallback if the query fails."""
    try:
        return int(pltpu.get_tpu_info().vmem_capacity_bytes)
    except Exception:
        return 64 * 1024 * 1024


def _choose_tiles(m_rows, V, E, budget_bytes, c_bytes, o_bytes,
                  tm_target, tv_target):
    """Pick (tm, tv) so the double-buffered working set fits `budget_bytes`."""
    tm = min(tm_target, _round_up(m_rows, 16))
    tv = min(tv_target, _round_up(V, 128))

    def need(tm_, tv_):
        # Double-buffered bf16 activation tile + double-buffered bf16 weight
        # tile + double-buffered output tile.
        return 2 * (tm_ * E + E * tv_) * c_bytes + 2 * tm_ * tv_ * o_bytes

    while need(tm, tv) > budget_bytes:
        if tv > 128 and 2 * E * tv * c_bytes >= 2 * tm * E * c_bytes:
            tv = max(128, (tv // 2) // 128 * 128)   # weight tile dominates
        elif tm > 16:
            tm = max(16, (tm // 2) // 16 * 16)
        elif tv > 128:
            tv = max(128, (tv // 2) // 128 * 128)
        else:
            break
    return tm, tv, need(tm, tv)


# ----------------------------- Pallas kernel -------------------------------

def dummy_gpt_kernel(h_ref, wt_ref, out_ref):
    # h_ref:   (tm, E)  bf16 -- flattened (B*S) rows of tok+pos embeddings
    # wt_ref:  (E, tv)  bf16 -- pre-transposed out_head weight tile
    # out_ref: (tm, tv)      -- logits tile (f32 by default)
    out_ref[...] = jnp.dot(
        h_ref[...], wt_ref[...], preferred_element_type=jnp.float32
    ).astype(out_ref.dtype)


# ------------------------------- wrapper ------------------------------------

def make_dummy_gpt_forward(tok_emb_table, pos_emb_table, out_head_w, *,
                           compute_dtype=jnp.bfloat16, out_dtype=jnp.float32,
                           tm_target=512, tv_target=4096):
    """Build a Pallas forward for DummyGPTModel.

    One-time work (weight cast/transpose/pad, tile selection, VMEM budgeting)
    happens here; the returned `forward(token_ids)` only touches
    token-dependent tensors per call.

    tok_emb_table: f32 [vocab, E]
    pos_emb_table: f32 [context, E]
    out_head_w:    f32 [vocab, E]   (PyTorch Linear weight layout [out, in])
    returns:       forward(token_ids int32 [B, S]) -> [B, S, vocab] out_dtype
    """
    V, E = out_head_w.shape
    C = pos_emb_table.shape[0]

    c_bytes = jnp.dtype(compute_dtype).itemsize
    o_bytes = jnp.dtype(out_dtype).itemsize

    vmem_cap = _vmem_capacity_bytes()
    budget = int(0.70 * vmem_cap)            # headroom for Mosaic internal scratch

    # Choose tiles assuming a full-height M tile; per call tm only shrinks.
    tm_full, tv, need_full = _choose_tiles(tm_target, V, E, budget,
                                           c_bytes, o_bytes,
                                           tm_target, tv_target)
    vmem_limit = int(min(int(0.90 * vmem_cap),
                         max(int(1.25 * need_full), 32 * 1024 * 1024)))

    V_pad = _round_up(V, tv)
    n_v = V_pad // tv

    # One-time weight layout pass: bf16 cast + transpose to (E, V) + pad V.
    w_t = jnp.asarray(out_head_w, dtype=compute_dtype).T            # (E, V)
    if V_pad != V:
        w_t = jnp.pad(w_t, ((0, 0), (0, V_pad - V)))

    tok_c = jnp.asarray(tok_emb_table)
    pos_c = jnp.asarray(pos_emb_table)

    def forward(token_ids):
        B, S = token_ids.shape
        assert S <= C, f"sequence length {S} exceeds context length {C}"
        M = B * S

        tm = min(tm_full, _round_up(M, 16))
        M_pad = _round_up(M, tm)
        n_m = M_pad // tm

        # Embedding gather + positional add + bf16 cast (XLA fuses this into a
        # single pass over the gathered rows).
        # TODO(synk): for decode-sized M this could be fused into the kernel
        # (scalar-prefetched ids + in-VMEM gather); at large V the wrapper-side
        # gather is preferable since h would otherwise be re-gathered once per
        # vocab tile.
        tok = jnp.take(tok_c, token_ids, axis=0)                     # (B, S, E)
        h = (tok + pos_c[:S][None]).astype(compute_dtype).reshape(M, E)
        if M_pad != M:
            h = jnp.pad(h, ((0, M_pad - M), (0, 0)))

        logits_pad = pl.pallas_call(
            dummy_gpt_kernel,
            out_shape=jax.ShapeDtypeStruct((M_pad, V_pad), out_dtype),
            grid_spec=pltpu.PrefetchScalarGridSpec(
                num_scalar_prefetch=0,
                grid=(n_v, n_m),                                 # vocab outer, rows inner
                in_specs=[
                    pl.BlockSpec((tm, E), lambda j, i: (i, 0)),  # activations
                    pl.BlockSpec((E, tv), lambda j, i: (0, j)),  # weight: VMEM-resident over i
                ],
                out_specs=pl.BlockSpec((tm, tv), lambda j, i: (i, j)),
            ),
            compiler_params=pltpu.CompilerParams(
                dimension_semantics=("parallel", "parallel"),
                vmem_limit_bytes=vmem_limit),
        )(h, w_t)

        return logits_pad[:M, :V].reshape(B, S, V)

    return jax.jit(forward)


# --------------------------------- main -------------------------------------

if __name__ == "__main__":
    # Small config consistent with the module's __init__.
    cfg = dict(vocab_size=128, context=16, emb_dim=32, drop_rate=0.1, n_layers=2)
    B, S = 2, 8

    key = jax.random.PRNGKey(0)
    k_tok, k_pos, k_out, k_ids = jax.random.split(key, 4)

    tok_emb_table = 0.02 * jax.random.normal(
        k_tok, (cfg["vocab_size"], cfg["emb_dim"]), dtype=jnp.float32)
    pos_emb_table = 0.02 * jax.random.normal(
        k_pos, (cfg["context"], cfg["emb_dim"]), dtype=jnp.float32)
    out_head_w = 0.02 * jax.random.normal(
        k_out, (cfg["vocab_size"], cfg["emb_dim"]), dtype=jnp.float32)

    token_ids = jax.random.randint(k_ids, (B, S), 0, cfg["vocab_size"],
                                   dtype=jnp.int32)

    forward = make_dummy_gpt_forward(tok_emb_table, pos_emb_table, out_head_w)
    logits = jax.block_until_ready(forward(token_ids))

    # Pure-JAX f32 reference of the forward semantics (kernel computes in bf16
    # with f32 accumulation -> bf16-appropriate tolerances).
    ref = (jnp.take(tok_emb_table, token_ids, axis=0)
           + pos_emb_table[:S][None]) @ out_head_w.T
    assert logits.shape == (B, S, cfg["vocab_size"])
    assert jnp.allclose(logits, ref, atol=1e-3, rtol=2e-2), (
        float(jnp.max(jnp.abs(logits - ref))))

    print("KERNEL_OK")
</pallas_src>

<mosaic_0001>
module attributes {stable_mosaic.version = 11 : i64} {
  func.func @dummy_gpt_kernel(%arg0: i32, %arg1: i32, %arg2: memref<16x32xbf16, #tpu.memory_space<vmem>>, %arg3: memref<32x128xbf16, #tpu.memory_space<vmem>>, %arg4: memref<16x128xf32, #tpu.memory_space<vmem>>) attributes {dimension_semantics = [#tpu.dimension_semantics<parallel>, #tpu.dimension_semantics<parallel>], iteration_bounds = array<i64: 1, 1>, scalar_prefetch = 0 : i64, scratch_operands = 0 : i64, tpu.core_type = #tpu.core_type<tc>, window_params = [{transform_indices = @transform_0, window_bounds = array<i64: 16, 32>}, {transform_indices = @transform_1, window_bounds = array<i64: 32, 128>}, {transform_indices = @transform_2, window_bounds = array<i64: 16, 128>}]} {
    %c0 = arith.constant 0 : index
    %c0_0 = arith.constant 0 : index
    %0 = vector.load %arg2[%c0, %c0_0] : memref<16x32xbf16, #tpu.memory_space<vmem>>, vector<16x32xbf16>
    %c0_1 = arith.constant 0 : index
    %c0_2 = arith.constant 0 : index
    %1 = vector.load %arg3[%c0_1, %c0_2] : memref<32x128xbf16, #tpu.memory_space<vmem>>, vector<32x128xbf16>
    %cst = arith.constant dense<0.000000e+00> : vector<16x128xf32>
    %2 = tpu.matmul %0, %1, %cst {dimension_numbers = #tpu.dot_dimension_numbers<[1], [0], [0], [1], [0, 0, 1, 1], [], []>} : vector<16x32xbf16>, vector<32x128xbf16>, vector<16x128xf32> -> vector<16x128xf32>
    %c0_3 = arith.constant 0 : index
    %c0_4 = arith.constant 0 : index
    %3 = vector.load %arg4[%c0_3, %c0_4] : memref<16x128xf32, #tpu.memory_space<vmem>>, vector<16x128xf32>
    tpu.vector_store %arg4[%c0_3, %c0_4], %2 {strides = array<i32>} : memref<16x128xf32, #tpu.memory_space<vmem>>, vector<16x128xf32>,
    return
  }
  func.func @transform_0(%arg0: i32, %arg1: i32) -> (i32, i32) {
    %c0_i32 = arith.constant 0 : i32
    %c0_i32_0 = arith.constant 0 : i32
    return %arg1, %c0_i32 : i32, i32
  }
  func.func @transform_1(%arg0: i32, %arg1: i32) -> (i32, i32) {
    %c0_i32 = arith.constant 0 : i32
    %c0_i32_0 = arith.constant 0 : i32
    return %c0_i32, %arg0 : i32, i32
  }
  func.func @transform_2(%arg0: i32, %arg1: i32) -> (i32, i32) {
    %c0_i32 = arith.constant 0 : i32
    return %arg1, %arg0 : i32, i32
  }
}

</mosaic_0001>

<llo_original>
// kernel: forward.1
$region0: #{forward.1}
  #allocation0 [shape = 'u32[]', space=smem, size = 0x4, offset = 0x4, fixed_abs, tag = 'smem constant byte address 0x4 - core index']
  #allocation1 [shape = 'u32[144,128]{1,0:T(1,128)}', space=vmem, size = 0x12000, scoped, tag = 'internal scratch']
  %s0 = inlined_call_operand.vmem [shape: bf16[16,32], index: 0, kind: input, shape index: {}]
  %s1 = inlined_call_operand.vmem [shape: bf16[32,128], index: 1, kind: input, shape index: {}]
  %s2 = inlined_call_operand.hbm [shape: f32[16,128], index: 2, kind: output, shape index: {}]
  %s3 = sld [smem:[#allocation0]]
  $region18: #{forward.1} parent=0
    _
  %s5 = ssub.s32 1, %s3
  %s6 = scalar_select 0, %s5, %s3
  $region1: #{forward.1} parent=0
    #allocation2 [shape = 'u8[8192]{0}', space=vmem, size = 0x2000, scoped, tag = 'output window, operand 0, single buffered']
    #allocation3 [shape = 's32[1]{0}', space=sflag, size = 0x4, scoped, tag = 'scoped memory for forward.1']
    %7 = vsyncpa [#allocation3], 0
    // Predicated region
    $region2: #{forward.1} parent=1 // pred_check
      _
    $region3: #{forward.1} parent=1 // pred_check_branch
      %9 = sbr.rel (0) target = $region5
    $region4: #{forward.1} parent=1 // pred_region
      _
    $region5: #{forward.1} parent=1 // pred_fallthru
      _
    // Predicated region
    $region6: #{forward.1} parent=1 // pred_check
      _
    $region7: #{forward.1} parent=1 // pred_check_branch
      %11 = sbr.rel (0) target = $region9
    $region8: #{forward.1} parent=1 // pred_region
      _
    $region9: #{forward.1} parent=1 // pred_fallthru
      _
    %v13 = vld [vmem:[%s0] sm:$0xf]
    %v14 = vld [vmem:[%s0 + $0x4] sm:$0xf]
    %v15 = vld [vmem:[%s1] sm:$0xf]
    %v16 = vld [vmem:[%s1 + $0x4] sm:$0xf]
    %v17 = vld [vmem:[%s1 + $0x8] sm:$0xf]
    %v18 = vld [vmem:[%s1 + $0xc] sm:$0xf]
    %v21 = vunpack.c.l.b16 %v13
    %v22 = vunpack.c.l.b16 %v14
    %v23 = vpack.c.b16 %v22, %v21
    %v28 = vunpack.c.l.b16 %v15
    %v29 = vunpack.c.l.b16 %v16
    %v30 = vunpack.c.l.b16 %v17
    %v31 = vunpack.c.l.b16 %v18
    %v32 = vpack.c.b16 %v29, %v28
    %v33 = vpack.c.b16 %v31, %v30
    %vm36 = vcmask 261120
    %v38 = vsel %vm36, %v23, 0
    %40 = vmatprep.subr.bf16.mxu0 0
    %41 = vmatpush1.bf16.msra.mxu0 %v32
    %42 = vmatprep.subr.bf16.mxu0 0
    %43 = vmatpush1.bf16.msra.mxu0 %v33
    %44 = vmatprep.subr.bf16.mxu0 0
    %45 = vmatpush1.bf16.msra.mxu0 0
    %46 = vmatprep.subr.bf16.mxu0 0
    %47 = vmatpush1.bf16.msra.mxu0 0
    %48 = vmatprep.subr.bf16.mxu0 0
    %49 = vmatpush1.bf16.msra.mxu0 0
    %50 = vmatprep.subr.bf16.mxu0 0
    %51 = vmatpush1.bf16.msra.mxu0 0
    %52 = vmatprep.subr.bf16.mxu0 0
    %53 = vmatpush1.bf16.msra.mxu0 0
    %54 = vmatprep.subr.bf16.mxu0 0
    %55 = vmatpush1.bf16.msra.mxu0 0
    %56 = vmatprep.subr.bf16.mxu0 0
    %57 = vmatpush1.bf16.msra.mxu0 0
    %58 = vmatprep.subr.bf16.mxu0 0
    %59 = vmatpush1.bf16.msra.mxu0 0
    %60 = vmatprep.subr.bf16.mxu0 0
    %61 = vmatpush1.bf16.msra.mxu0 0
    %62 = vmatprep.subr.bf16.mxu0 0
    %63 = vmatpush1.bf16.msra.mxu0 0
    %64 = vmatprep.subr.bf16.mxu0 0
    %65 = vmatpush1.bf16.msra.mxu0 0
    %66 = vmatprep.subr.bf16.mxu0 0
    %67 = vmatpush1.bf16.msra.mxu0 0
    %68 = vmatprep.subr.bf16.mxu0 0
    %69 = vmatpush1.bf16.msra.mxu0 0
    %70 = vmatprep.subr.bf16.mxu0 0
    %71 = vmatpush1.bf16.msra.mxu0 0
    %72 = vmatprep.mubr.bf16.mxu0 0
    %73 = vmatmul.mubr.bf16.gmra.mrb[0].mxu0 %v38
    %v74 = vpop.f32.mrb[0].mxu0
    %v75 = vadd.f32 0.0, %v74
    %v76 = vpop.f32.mrb[0].mxu0
    %v77 = vpop.f32.mrb[0].mxu0
    %v78 = vadd.f32 0.0, %v77
    %v79 = vpop.f32.mrb[0].mxu0
    %80 = vdwg.mxu0
    %81 = vst [vmem:[#allocation2] sm:$0xff] %v75
    %82 = vst [vmem:[#allocation2 + $0x8] sm:$0xff] %v78
    // Predicated region
    $region10: #{forward.1} parent=1 // pred_check
      _
    $region11: #{forward.1} parent=1 // pred_check_branch
      %84 = sbr.rel (0) target = $region13
    $region12: #{forward.1} parent=1 // pred_region
      %s86 = ssub.s32 256, 256
      %87 = vsyncadd [#allocation3], %s86
      %s88 = sshll.u32 [#allocation2], 4
      %s89 = int_to_ptr.vmem [resolvable:$true] %s88
      %94 = dma.vmem_to_hbm [thread:$0]  %s89, 256, %s2, [#allocation3], 128, 128, 8
    $region13: #{forward.1} parent=1 // pred_fallthru
      _
    // Predicated region
    $region14: #{forward.1} parent=1 // pred_check
      _
    $region15: #{forward.1} parent=1 // pred_check_branch
      %96 = sbr.rel (0) target = $region17
    $region16: #{forward.1} parent=1 // pred_region
      %97 = dma.done [#allocation3], 256
    $region17: #{forward.1} parent=1 // pred_fallthru
      _
    %98 = vsyncpa [#allocation3], 1

</llo_original>
